<compile_context>
chip_gen: v7x
topology: tpu7x:2x2x1
jax: 0.10.0
libtpu: 0.0.40
codegen_flags: <defaults>
</compile_context>

<pallas_src>
import functools

import jax
import jax.numpy as jnp
from jax import lax
from jax.experimental import pallas as pl
from jax.experimental.pallas import tpu as pltpu


def _round_up(x, m):
    return ((x + m - 1) // m) * m


def _choose_block(B, block_b, min_steps=4):
    """Batch tile: as large as possible (amortize ~0.35us/step overhead, big
    MXU M tiles) but with >= min_steps grid steps when the batch allows, so
    v7x's two TensorCores both get work and ragged-pad waste stays small."""
    Bq = _round_up(B, 8)
    bb = min(_round_up(block_b, 8), Bq)
    if Bq > 8 and Bq // bb < min_steps:
        bb = max(8, _round_up(-(-Bq // min_steps), 8))
    return bb


def _ppo_kernel(x_ref,
                w1_ref, b1_ref, w2_ref, b2_ref,      # shared backbone
                wh1_ref, bh1_ref,                    # fused actor/critic layer 1
                wh2_ref, bh2_ref,                    # fused (block-diag) layer 2
                out_ref, *, action_dim):
    # bf16 operands on the MXU, f32 accumulation. Biases / softmax in f32.
    x = x_ref[...].astype(jnp.bfloat16)

    # shared backbone: Linear -> ReLU -> Linear -> ReLU
    h = jnp.dot(x, w1_ref[...], preferred_element_type=jnp.float32) + b1_ref[...]
    h = jnp.maximum(h, 0.0).astype(jnp.bfloat16)
    h = jnp.dot(h, w2_ref[...], preferred_element_type=jnp.float32) + b2_ref[...]
    h = jnp.maximum(h, 0.0).astype(jnp.bfloat16)

    # fused actor/critic first layers: y[:, :hidden]=actor.0, y[:, hidden:]=critic.0
    y = jnp.dot(h, wh1_ref[...], preferred_element_type=jnp.float32) + bh1_ref[...]
    y = jnp.maximum(y, 0.0).astype(jnp.bfloat16)

    # fused block-diagonal second layers -> lane slab:
    #   z[:, :action_dim]   = actor logits
    #   z[:, action_dim]    = critic value
    #   z[:, action_dim+1:] = exact zeros (padding, at most 7 lanes)
    z = jnp.dot(y, wh2_ref[...], preferred_element_type=jnp.float32) + bh2_ref[...]

    lane = lax.broadcasted_iota(jnp.int32, z.shape, 1)
    is_logit = lane < action_dim
    is_value = lane == action_dim

    # masked softmax over the logit lanes only (exact f32 normalization)
    masked_logits = jnp.where(is_logit, z, -jnp.inf)
    m = jnp.max(masked_logits, axis=-1, keepdims=True)
    e = jnp.exp(masked_logits - m)                    # padded lanes -> exp(-inf)=0
    denom = jnp.sum(e, axis=-1, keepdims=True)
    probs = e / denom

    # assemble output: probs | value | zeros
    out_ref[...] = jnp.where(is_logit, probs, jnp.where(is_value, z, 0.0))


def init_ppo_params(key, state_dim, action_dim, hidden_dim=128):
    """PyTorch-style (uniform +/- 1/sqrt(fan_in)) init; weights stored [in, out]."""
    def linear(key, fan_in, fan_out):
        kw, kb = jax.random.split(key)
        bound = 1.0 / jnp.sqrt(jnp.float32(fan_in))
        w = jax.random.uniform(kw, (fan_in, fan_out), jnp.float32, -bound, bound)
        b = jax.random.uniform(kb, (1, fan_out), jnp.float32, -bound, bound)
        return w, b

    keys = jax.random.split(key, 6)
    w1, b1 = linear(keys[0], state_dim, hidden_dim)      # shared.0
    w2, b2 = linear(keys[1], hidden_dim, hidden_dim)     # shared.2
    wa1, ba1 = linear(keys[2], hidden_dim, hidden_dim)   # actor.0
    wa2, ba2 = linear(keys[3], hidden_dim, action_dim)   # actor.2
    wc1, bc1 = linear(keys[4], hidden_dim, hidden_dim)   # critic.0
    wc2, bc2 = linear(keys[5], hidden_dim, 1)            # critic.2
    return (w1, b1, w2, b2, wa1, ba1, wa2, ba2, wc1, bc1, wc2, bc2)


def pack_ppo_params(params):
    """One-time pre-pack (hoisted out of the per-call wrapper):
      * actor.0/critic.0 fused into one [hidden, 2*hidden] matmul,
      * actor.2/critic.2 fused into one block-diagonal [2*hidden, out_pad]
        matmul whose output lanes are  logits | value | zero-pad,
      * matmul weights cast to bf16 (biases stay f32)."""
    (w1, b1, w2, b2, wa1, ba1, wa2, ba2, wc1, bc1, wc2, bc2) = params
    hidden_dim = w1.shape[1]
    action_dim = wa2.shape[1]
    out_pad = _round_up(action_dim + 1, 8)               # small, lane-legal slab

    wh1 = jnp.concatenate([wa1, wc1], axis=1)             # [hidden, 2*hidden]
    bh1 = jnp.concatenate([ba1, bc1], axis=1)              # [1, 2*hidden]

    wh2 = jnp.zeros((2 * hidden_dim, out_pad), jnp.float32)
    wh2 = wh2.at[:hidden_dim, :action_dim].set(wa2)        # actor.2 block
    wh2 = wh2.at[hidden_dim:, action_dim].set(wc2[:, 0])   # critic.2 block
    bh2 = jnp.zeros((1, out_pad), jnp.float32)
    bh2 = bh2.at[:, :action_dim].set(ba2)
    bh2 = bh2.at[:, action_dim].set(bc2[:, 0])

    packed = (w1.astype(jnp.bfloat16), b1.astype(jnp.float32),
              w2.astype(jnp.bfloat16), b2.astype(jnp.float32),
              wh1.astype(jnp.bfloat16), bh1.astype(jnp.float32),
              wh2.astype(jnp.bfloat16), bh2.astype(jnp.float32))
    packed = jax.tree_util.tree_map(jax.block_until_ready,
                                    jax.device_put(packed))
    return packed, action_dim


@functools.partial(jax.jit, static_argnames=("action_dim", "block_b"))
def ppo_forward(x, packed_params, action_dim, block_b=1024):
    B, state_dim = x.shape
    w1, b1, w2, b2, wh1, bh1, wh2, bh2 = packed_params
    out_pad = wh2.shape[1]

    # ---- batch tile: big for MXU / overhead amortization, >=4 grid steps
    #      when the batch allows (v7x megacore), pad ragged B ----
    bb = _choose_block(B, block_b)
    Bp = _round_up(B, bb)
    if Bp != B:
        x = jnp.pad(x, ((0, Bp - B), (0, 0)))
    grid = (Bp // bb,)

    def batch_spec(cols):
        return pl.BlockSpec((bb, cols), lambda i: (i, 0))

    def full_spec(arr):
        # Constant index map -> parameter block stays resident in VMEM.
        return pl.BlockSpec(arr.shape, lambda i: (0, 0))

    param_list = [w1, b1, w2, b2, wh1, bh1, wh2, bh2]

    grid_spec = pltpu.PrefetchScalarGridSpec(
        num_scalar_prefetch=0,
        grid=grid,
        in_specs=[batch_spec(state_dim)] + [full_spec(p) for p in param_list],
        out_specs=batch_spec(out_pad),
    )

    out = pl.pallas_call(
        functools.partial(_ppo_kernel, action_dim=action_dim),
        out_shape=jax.ShapeDtypeStruct((Bp, out_pad), jnp.float32),
        grid_spec=grid_spec,
        compiler_params=pltpu.CompilerParams(
            dimension_semantics=("parallel",)),
    )(x, *param_list)

    probs = out[:B, :action_dim]
    value = out[:B, action_dim:action_dim + 1]
    return probs, value


def ppo_forward_ref(x, params):
    """Pure-JAX f32 reference, mirrors the PyTorch forward."""
    (w1, b1, w2, b2, wa1, ba1, wa2, ba2, wc1, bc1, wc2, bc2) = params
    h = jax.nn.relu(x @ w1 + b1)
    h = jax.nn.relu(h @ w2 + b2)
    a = jax.nn.relu(h @ wa1 + ba1)
    probs = jax.nn.softmax(a @ wa2 + ba2, axis=-1)
    c = jax.nn.relu(h @ wc1 + bc1)
    value = c @ wc2 + bc2
    return probs, value


if __name__ == "__main__":
    # Small, module-consistent shapes: Snake-like state vector, 4 actions.
    B, STATE_DIM, ACTION_DIM, HIDDEN_DIM = 8, 16, 4, 32

    key = jax.random.PRNGKey(0)
    k_params, k_x, k_x2 = jax.random.split(key, 3)
    params = init_ppo_params(k_params, STATE_DIM, ACTION_DIM, HIDDEN_DIM)
    packed, action_dim = pack_ppo_params(params)   # one-time pre-pack

    # bf16-matmul kernel vs f32 reference: loose element tolerance, but the
    # softmax normalization is exact f32 so sum-to-1 stays tight.
    ATOL = 5e-2

    # --- small test (single grid step) ---
    x = jax.random.normal(k_x, (B, STATE_DIM), jnp.float32)
    probs, value = ppo_forward(x, packed, action_dim)
    jax.block_until_ready((probs, value))

    probs_ref, value_ref = ppo_forward_ref(x, params)
    assert probs.shape == (B, ACTION_DIM) and value.shape == (B, 1)
    assert jnp.allclose(probs, probs_ref, atol=ATOL, rtol=ATOL)
    assert jnp.allclose(value, value_ref, atol=ATOL, rtol=ATOL)
    assert jnp.allclose(jnp.sum(probs, axis=-1), 1.0, atol=1e-4)

    # --- ragged batch / multi-step grid test (exercises padding + tiling) ---
    B2 = 200
    x2 = jax.random.normal(k_x2, (B2, STATE_DIM), jnp.float32)
    probs2, value2 = ppo_forward(x2, packed, action_dim, block_b=64)
    jax.block_until_ready((probs2, value2))
    probs2_ref, value2_ref = ppo_forward_ref(x2, params)
    assert probs2.shape == (B2, ACTION_DIM) and value2.shape == (B2, 1)
    assert jnp.allclose(probs2, probs2_ref, atol=ATOL, rtol=ATOL)
    assert jnp.allclose(value2, value2_ref, atol=ATOL, rtol=ATOL)
    assert jnp.allclose(jnp.sum(probs2, axis=-1), 1.0, atol=1e-4)

    print("KERNEL_OK")
</pallas_src>

<mosaic_0001>
module attributes {stable_mosaic.version = 11 : i64} {
  func.func @_ppo_kernel(%arg0: i32, %arg1: memref<8x16xf32, #tpu.memory_space<vmem>>, %arg2: memref<16x32xbf16, #tpu.memory_space<vmem>>, %arg3: memref<1x32xf32, #tpu.memory_space<vmem>>, %arg4: memref<32x32xbf16, #tpu.memory_space<vmem>>, %arg5: memref<1x32xf32, #tpu.memory_space<vmem>>, %arg6: memref<32x64xbf16, #tpu.memory_space<vmem>>, %arg7: memref<1x64xf32, #tpu.memory_space<vmem>>, %arg8: memref<64x8xbf16, #tpu.memory_space<vmem>>, %arg9: memref<1x8xf32, #tpu.memory_space<vmem>>, %arg10: memref<8x8xf32, #tpu.memory_space<vmem>>) attributes {dimension_semantics = [#tpu.dimension_semantics<parallel>], iteration_bounds = array<i64: 1>, scalar_prefetch = 0 : i64, scratch_operands = 0 : i64, tpu.core_type = #tpu.core_type<tc>, window_params = [{transform_indices = @transform_0, window_bounds = array<i64: 8, 16>}, {pipeline_mode = #tpu.pipeline_mode<synchronous>, transform_indices = @transform_1, window_bounds = array<i64: 16, 32>}, {pipeline_mode = #tpu.pipeline_mode<synchronous>, transform_indices = @transform_2, window_bounds = array<i64: 1, 32>}, {pipeline_mode = #tpu.pipeline_mode<synchronous>, transform_indices = @transform_3, window_bounds = array<i64: 32, 32>}, {pipeline_mode = #tpu.pipeline_mode<synchronous>, transform_indices = @transform_4, window_bounds = array<i64: 1, 32>}, {pipeline_mode = #tpu.pipeline_mode<synchronous>, transform_indices = @transform_5, window_bounds = array<i64: 32, 64>}, {pipeline_mode = #tpu.pipeline_mode<synchronous>, transform_indices = @transform_6, window_bounds = array<i64: 1, 64>}, {pipeline_mode = #tpu.pipeline_mode<synchronous>, transform_indices = @transform_7, window_bounds = array<i64: 64, 8>}, {pipeline_mode = #tpu.pipeline_mode<synchronous>, transform_indices = @transform_8, window_bounds = array<i64: 1, 8>}, {transform_indices = @transform_9, window_bounds = array<i64: 8, 8>}]} {
    %c0 = arith.constant 0 : index
    %c0_0 = arith.constant 0 : index
    %0 = vector.load %arg1[%c0, %c0_0] : memref<8x16xf32, #tpu.memory_space<vmem>>, vector<8x16xf32>
    %1 = arith.truncf %0 : vector<8x16xf32> to vector<8x16xbf16>
    %c0_1 = arith.constant 0 : index
    %c0_2 = arith.constant 0 : index
    %2 = vector.load %arg2[%c0_1, %c0_2] : memref<16x32xbf16, #tpu.memory_space<vmem>>, vector<16x32xbf16>
    %cst = arith.constant dense<0.000000e+00> : vector<8x32xf32>
    %3 = tpu.matmul %1, %2, %cst {dimension_numbers = #tpu.dot_dimension_numbers<[1], [0], [0], [1], [0, 0, 1, 1], [], []>} : vector<8x16xbf16>, vector<16x32xbf16>, vector<8x32xf32> -> vector<8x32xf32>
    %c0_3 = arith.constant 0 : index
    %c0_4 = arith.constant 0 : index
    %4 = vector.load %arg3[%c0_3, %c0_4] : memref<1x32xf32, #tpu.memory_space<vmem>>, vector<1x32xf32>
    %5 = vector.broadcast %4 : vector<1x32xf32> to vector<8x32xf32>
    %6 = arith.addf %3, %5 : vector<8x32xf32>
    %cst_5 = arith.constant 0.000000e+00 : f32
    %7 = vector.broadcast %cst_5 : f32 to vector<8x32xf32>
    %8 = arith.maximumf %6, %7 : vector<8x32xf32>
    %9 = arith.truncf %8 : vector<8x32xf32> to vector<8x32xbf16>
    %c0_6 = arith.constant 0 : index
    %c0_7 = arith.constant 0 : index
    %10 = vector.load %arg4[%c0_6, %c0_7] : memref<32x32xbf16, #tpu.memory_space<vmem>>, vector<32x32xbf16>
    %cst_8 = arith.constant dense<0.000000e+00> : vector<8x32xf32>
    %11 = tpu.matmul %9, %10, %cst_8 {dimension_numbers = #tpu.dot_dimension_numbers<[1], [0], [0], [1], [0, 0, 1, 1], [], []>} : vector<8x32xbf16>, vector<32x32xbf16>, vector<8x32xf32> -> vector<8x32xf32>
    %c0_9 = arith.constant 0 : index
    %c0_10 = arith.constant 0 : index
    %12 = vector.load %arg5[%c0_9, %c0_10] : memref<1x32xf32, #tpu.memory_space<vmem>>, vector<1x32xf32>
    %13 = vector.broadcast %12 : vector<1x32xf32> to vector<8x32xf32>
    %14 = arith.addf %11, %13 : vector<8x32xf32>
    %cst_11 = arith.constant 0.000000e+00 : f32
    %15 = vector.broadcast %cst_11 : f32 to vector<8x32xf32>
    %16 = arith.maximumf %14, %15 : vector<8x32xf32>
    %17 = arith.truncf %16 : vector<8x32xf32> to vector<8x32xbf16>
    %c0_12 = arith.constant 0 : index
    %c0_13 = arith.constant 0 : index
    %18 = vector.load %arg6[%c0_12, %c0_13] : memref<32x64xbf16, #tpu.memory_space<vmem>>, vector<32x64xbf16>
    %cst_14 = arith.constant dense<0.000000e+00> : vector<8x64xf32>
    %19 = tpu.matmul %17, %18, %cst_14 {dimension_numbers = #tpu.dot_dimension_numbers<[1], [0], [0], [1], [0, 0, 1, 1], [], []>} : vector<8x32xbf16>, vector<32x64xbf16>, vector<8x64xf32> -> vector<8x64xf32>
    %c0_15 = arith.constant 0 : index
    %c0_16 = arith.constant 0 : index
    %20 = vector.load %arg7[%c0_15, %c0_16] : memref<1x64xf32, #tpu.memory_space<vmem>>, vector<1x64xf32>
    %21 = vector.broadcast %20 : vector<1x64xf32> to vector<8x64xf32>
    %22 = arith.addf %19, %21 : vector<8x64xf32>
    %cst_17 = arith.constant 0.000000e+00 : f32
    %23 = vector.broadcast %cst_17 : f32 to vector<8x64xf32>
    %24 = arith.maximumf %22, %23 : vector<8x64xf32>
    %25 = arith.truncf %24 : vector<8x64xf32> to vector<8x64xbf16>
    %c0_18 = arith.constant 0 : index
    %c0_19 = arith.constant 0 : index
    %26 = vector.load %arg8[%c0_18, %c0_19] : memref<64x8xbf16, #tpu.memory_space<vmem>>, vector<64x8xbf16>
    %cst_20 = arith.constant dense<0.000000e+00> : vector<8x8xf32>
    %27 = tpu.matmul %25, %26, %cst_20 {dimension_numbers = #tpu.dot_dimension_numbers<[1], [0], [0], [1], [0, 0, 1, 1], [], []>} : vector<8x64xbf16>, vector<64x8xbf16>, vector<8x8xf32> -> vector<8x8xf32>
    %c0_21 = arith.constant 0 : index
    %c0_22 = arith.constant 0 : index
    %28 = vector.load %arg9[%c0_21, %c0_22] : memref<1x8xf32, #tpu.memory_space<vmem>>, vector<1x8xf32>
    %29 = vector.broadcast %28 : vector<1x8xf32> to vector<8x8xf32>
    %30 = arith.addf %27, %29 : vector<8x8xf32>
    %31 = tpu.iota {dimensions = array<i32: 1>} : vector<8x8xi32>
    %c4_i32 = arith.constant 4 : i32
    %32 = vector.broadcast %c4_i32 : i32 to vector<8x8xi32>
    %33 = arith.cmpi slt, %31, %32 : vector<8x8xi32>
    %c4_i32_23 = arith.constant 4 : i32
    %34 = vector.broadcast %c4_i32_23 : i32 to vector<8x8xi32>
    %35 = arith.cmpi eq, %31, %34 : vector<8x8xi32>
    %cst_24 = arith.constant 0xFF800000 : f32
    %36 = vector.broadcast %cst_24 : f32 to vector<8x8xf32>
    %37 = arith.select %33, %30, %36 : vector<8x8xi1>, vector<8x8xf32>
    %cst_25 = arith.constant dense<0xFF800000> : vector<8xf32>
    %38 = vector.multi_reduction <maximumf>, %37, %cst_25 [1] : vector<8x8xf32> to vector<8xf32>
    %39 = vector.shape_cast %38 : vector<8xf32> to vector<8x1xf32>
    %40 = vector.broadcast %39 : vector<8x1xf32> to vector<8x8xf32>
    %41 = arith.subf %37, %40 : vector<8x8xf32>
    %42 = math.exp %41 : vector<8x8xf32>
    %cst_26 = arith.constant dense<0.000000e+00> : vector<8xf32>
    %43 = vector.multi_reduction <add>, %42, %cst_26 [1] : vector<8x8xf32> to vector<8xf32>
    %44 = vector.shape_cast %43 : vector<8xf32> to vector<8x1xf32>
    %45 = vector.broadcast %44 : vector<8x1xf32> to vector<8x8xf32>
    %46 = arith.divf %42, %45 : vector<8x8xf32>
    %cst_27 = arith.constant 0.000000e+00 : f32
    %47 = vector.broadcast %cst_27 : f32 to vector<8x8xf32>
    %48 = arith.select %35, %30, %47 : vector<8x8xi1>, vector<8x8xf32>
    %49 = arith.select %33, %46, %48 : vector<8x8xi1>, vector<8x8xf32>
    %c0_28 = arith.constant 0 : index
    %c0_29 = arith.constant 0 : index
    %50 = vector.load %arg10[%c0_28, %c0_29] : memref<8x8xf32, #tpu.memory_space<vmem>>, vector<8x8xf32>
    tpu.vector_store %arg10[%c0_28, %c0_29], %49 {strides = array<i32>} : memref<8x8xf32, #tpu.memory_space<vmem>>, vector<8x8xf32>,
    return
  }
  func.func @transform_0(%arg0: i32) -> (i32, i32) {
    %c0_i32 = arith.constant 0 : i32
    %c0_i32_0 = arith.constant 0 : i32
    return %arg0, %c0_i32 : i32, i32
  }
  func.func @transform_1(%arg0: i32) -> (i32, i32) {
    %c0_i32 = arith.constant 0 : i32
    %c0_i32_0 = arith.constant 0 : i32
    %c0_i32_1 = arith.constant 0 : i32
    return %c0_i32, %c0_i32_0 : i32, i32
  }
  func.func @transform_2(%arg0: i32) -> (i32, i32) {
    %c0_i32 = arith.constant 0 : i32
    %c0_i32_0 = arith.constant 0 : i32
    %c0_i32_1 = arith.constant 0 : i32
    return %c0_i32, %c0_i32_0 : i32, i32
  }
  func.func @transform_3(%arg0: i32) -> (i32, i32) {
    %c0_i32 = arith.constant 0 : i32
    %c0_i32_0 = arith.constant 0 : i32
    %c0_i32_1 = arith.constant 0 : i32
    return %c0_i32, %c0_i32_0 : i32, i32
  }
  func.func @transform_4(%arg0: i32) -> (i32, i32) {
    %c0_i32 = arith.constant 0 : i32
    %c0_i32_0 = arith.constant 0 : i32
    %c0_i32_1 = arith.constant 0 : i32
    return %c0_i32, %c0_i32_0 : i32, i32
  }
  func.func @transform_5(%arg0: i32) -> (i32, i32) {
    %c0_i32 = arith.constant 0 : i32
    %c0_i32_0 = arith.constant 0 : i32
    %c0_i32_1 = arith.constant 0 : i32
    return %c0_i32, %c0_i32_0 : i32, i32
  }
  func.func @transform_6(%arg0: i32) -> (i32, i32) {
    %c0_i32 = arith.constant 0 : i32
    %c0_i32_0 = arith.constant 0 : i32
    %c0_i32_1 = arith.constant 0 : i32
    return %c0_i32, %c0_i32_0 : i32, i32
  }
  func.func @transform_7(%arg0: i32) -> (i32, i32) {
    %c0_i32 = arith.constant 0 : i32
    %c0_i32_0 = arith.constant 0 : i32
    %c0_i32_1 = arith.constant 0 : i32
    return %c0_i32, %c0_i32_0 : i32, i32
  }
  func.func @transform_8(%arg0: i32) -> (i32, i32) {
    %c0_i32 = arith.constant 0 : i32
    %c0_i32_0 = arith.constant 0 : i32
    %c0_i32_1 = arith.constant 0 : i32
    return %c0_i32, %c0_i32_0 : i32, i32
  }
  func.func @transform_9(%arg0: i32) -> (i32, i32) {
    %c0_i32 = arith.constant 0 : i32
    %c0_i32_0 = arith.constant 0 : i32
    return %arg0, %c0_i32 : i32, i32
  }
}

</mosaic_0001>

<llo_original>
// kernel: ppo_forward.1
$region0: #{ppo_forward.1}
  #allocation0 [shape = 'u32[]', space=smem, size = 0x4, offset = 0x4, fixed_abs, tag = 'smem constant byte address 0x4 - core index']
  #allocation1 [shape = 'u32[144,128]{1,0:T(1,128)}', space=vmem, size = 0x12000, scoped, tag = 'internal scratch']
  %s0 = inlined_call_operand.hbm [shape: f32[8,16], index: 0, kind: input, shape index: {}]
  %s1 = inlined_call_operand.hbm [shape: bf16[16,32], index: 1, kind: input, shape index: {}]
  %s2 = inlined_call_operand.vmem [shape: f32[1,32], index: 2, kind: input, shape index: {}]
  %s3 = inlined_call_operand.vmem [shape: bf16[32,32], index: 3, kind: input, shape index: {}]
  %s4 = inlined_call_operand.vmem [shape: f32[1,32], index: 4, kind: input, shape index: {}]
  %s5 = inlined_call_operand.vmem [shape: bf16[32,64], index: 5, kind: input, shape index: {}]
  %s6 = inlined_call_operand.vmem [shape: f32[1,64], index: 6, kind: input, shape index: {}]
  %s7 = inlined_call_operand.vmem [shape: bf16[64,8], index: 7, kind: input, shape index: {}]
  %s8 = inlined_call_operand.vmem [shape: f32[1,8], index: 8, kind: input, shape index: {}]
  %s9 = inlined_call_operand.vmem [shape: f32[8,8], index: 9, kind: output, shape index: {}]
  %s10 = sld [smem:[#allocation0]]
  $region54: #{ppo_forward.1} parent=0
    _
  %s12 = ssub.s32 1, %s10
  %s13 = scalar_select 0, %s12, %s10
  $region1: #{ppo_forward.1} parent=0
    #allocation2 [shape = 'u8[4096]{0}', space=vmem, size = 0x1000, scoped, tag = 'input window, operand 0, single buffered']
    #allocation3 [shape = 's32[1]{0}', space=sflag, size = 0x4, scoped, tag = 'scoped memory for ppo_forward.1']
    #allocation4 [shape = 'u8[4096]{0}', space=vmem, size = 0x1000, scoped, tag = 'input window, operand 1, single buffered']
    #allocation5 [shape = 's32[1]{0}', space=sflag, size = 0x4, scoped, tag = 'scoped memory for ppo_forward.1']
    %14 = vsyncpa [#allocation3], 0
    %15 = vsyncpa [#allocation5], 0
    // Predicated region
    $region2: #{ppo_forward.1} parent=1 // pred_check
      _
    $region3: #{ppo_forward.1} parent=1 // pred_check_branch
      %17 = sbr.rel (0) target = $region5
    $region4: #{ppo_forward.1} parent=1 // pred_region
      %s19 = ssub.s32 128, 128
      %20 = vsyncadd [#allocation3], %s19
      %s22 = sshll.u32 [#allocation2], 4
      %s23 = int_to_ptr.vmem [resolvable:$true] %s22
      %25 = dma.hbm_to_vmem [thread:$0]  %s0, 128, %s23, [#allocation3]
    $region5: #{ppo_forward.1} parent=1 // pred_fallthru
      _
    // Predicated region
    $region6: #{ppo_forward.1} parent=1 // pred_check
      _
    $region7: #{ppo_forward.1} parent=1 // pred_check_branch
      %27 = sbr.rel (0) target = $region9
    $region8: #{ppo_forward.1} parent=1 // pred_region
      %s29 = ssub.s32 128, 128
      %30 = vsyncadd [#allocation5], %s29
      %s31 = sshll.u32 [#allocation4], 4
      %s32 = int_to_ptr.vmem [resolvable:$true] %s31
      %37 = dma.hbm_to_vmem [thread:$0]  %s1, 128, %s32, [#allocation5], 64, 64, 4
    $region9: #{ppo_forward.1} parent=1 // pred_fallthru
      _
    // Predicated region
    $region10: #{ppo_forward.1} parent=1 // pred_check
      _
    $region11: #{ppo_forward.1} parent=1 // pred_check_branch
      %39 = sbr.rel (0) target = $region13
    $region12: #{ppo_forward.1} parent=1 // pred_region
      _
    $region13: #{ppo_forward.1} parent=1 // pred_fallthru
      _
    // Predicated region
    $region14: #{ppo_forward.1} parent=1 // pred_check
      _
    $region15: #{ppo_forward.1} parent=1 // pred_check_branch
      %41 = sbr.rel (0) target = $region17
    $region16: #{ppo_forward.1} parent=1 // pred_region
      _
    $region17: #{ppo_forward.1} parent=1 // pred_fallthru
      _
    // Predicated region
    $region18: #{ppo_forward.1} parent=1 // pred_check
      _
    $region19: #{ppo_forward.1} parent=1 // pred_check_branch
      %43 = sbr.rel (0) target = $region21
    $region20: #{ppo_forward.1} parent=1 // pred_region
      _
    $region21: #{ppo_forward.1} parent=1 // pred_fallthru
      _
    // Predicated region
    $region22: #{ppo_forward.1} parent=1 // pred_check
      _
    $region23: #{ppo_forward.1} parent=1 // pred_check_branch
      %45 = sbr.rel (0) target = $region25
    $region24: #{ppo_forward.1} parent=1 // pred_region
      _
    $region25: #{ppo_forward.1} parent=1 // pred_fallthru
      _
    // Predicated region
    $region26: #{ppo_forward.1} parent=1 // pred_check
      _
    $region27: #{ppo_forward.1} parent=1 // pred_check_branch
      %47 = sbr.rel (0) target = $region29
    $region28: #{ppo_forward.1} parent=1 // pred_region
      _
    $region29: #{ppo_forward.1} parent=1 // pred_fallthru
      _
    // Predicated region
    $region30: #{ppo_forward.1} parent=1 // pred_check
      _
    $region31: #{ppo_forward.1} parent=1 // pred_check_branch
      %49 = sbr.rel (0) target = $region33
    $region32: #{ppo_forward.1} parent=1 // pred_region
      _
    $region33: #{ppo_forward.1} parent=1 // pred_fallthru
      _
    // Predicated region
    $region34: #{ppo_forward.1} parent=1 // pred_check
      _
    $region35: #{ppo_forward.1} parent=1 // pred_check_branch
      %51 = sbr.rel (0) target = $region37
    $region36: #{ppo_forward.1} parent=1 // pred_region
      _
    $region37: #{ppo_forward.1} parent=1 // pred_fallthru
      _
    // Predicated region
    $region38: #{ppo_forward.1} parent=1 // pred_check
      _
    $region39: #{ppo_forward.1} parent=1 // pred_check_branch
      %53 = sbr.rel (0) target = $region41
    $region40: #{ppo_forward.1} parent=1 // pred_region
      %54 = dma.done [#allocation3], 128
    $region41: #{ppo_forward.1} parent=1 // pred_fallthru
      _
    // Predicated region
    $region42: #{ppo_forward.1} parent=1 // pred_check
      _
    $region43: #{ppo_forward.1} parent=1 // pred_check_branch
      %56 = sbr.rel (0) target = $region45
    $region44: #{ppo_forward.1} parent=1 // pred_region
      %57 = dma.done [#allocation5], 128
    $region45: #{ppo_forward.1} parent=1 // pred_fallthru
      _
    %v59 = vld [vmem:[#allocation2] sm:$0xff]
    %v60 = vpack.c.bf16 %v59, %v59
    %v61 = vld [vmem:[#allocation4] sm:$0xf]
    %v62 = vld [vmem:[#allocation4 + $0x4] sm:$0xf]
    %v63 = vld [vmem:[%s2] sm:$0x1]
    %v65 = vlaneseq
    %v66 = vshrl.u32 %v65, 7
    %v67 = vsub.s32 0, %v66
    %v68 = vrot.slane %v63, %v67
    %v72 = vunpack.c.l.b16 %v61
    %v73 = vunpack.c.l.b16 %v62
    %v74 = vpack.c.b16 %v73, %v72
    %vm76 = vcmask 130048
    %v78 = vsel %vm76, %v60, 0
    %80 = vmatprep.subr.bf16.mxu0 0
    %81 = vmatpush1.bf16.msra.mxu0 %v74
    %82 = vmatprep.subr.bf16.mxu0 0
    %83 = vmatpush1.bf16.msra.mxu0 0
    %84 = vmatprep.subr.bf16.mxu0 0
    %85 = vmatpush1.bf16.msra.mxu0 0
    %86 = vmatprep.subr.bf16.mxu0 0
    %87 = vmatpush1.bf16.msra.mxu0 0
    %88 = vmatprep.subr.bf16.mxu0 0
    %89 = vmatpush1.bf16.msra.mxu0 0
    %90 = vmatprep.subr.bf16.mxu0 0
    %91 = vmatpush1.bf16.msra.mxu0 0
    %92 = vmatprep.subr.bf16.mxu0 0
    %93 = vmatpush1.bf16.msra.mxu0 0
    %94 = vmatprep.subr.bf16.mxu0 0
    %95 = vmatpush1.bf16.msra.mxu0 0
    %96 = vmatprep.subr.bf16.mxu0 0
    %97 = vmatpush1.bf16.msra.mxu0 0
    %98 = vmatprep.subr.bf16.mxu0 0
    %99 = vmatpush1.bf16.msra.mxu0 0
    %100 = vmatprep.subr.bf16.mxu0 0
    %101 = vmatpush1.bf16.msra.mxu0 0
    %102 = vmatprep.subr.bf16.mxu0 0
    %103 = vmatpush1.bf16.msra.mxu0 0
    %104 = vmatprep.subr.bf16.mxu0 0
    %105 = vmatpush1.bf16.msra.mxu0 0
    %106 = vmatprep.subr.bf16.mxu0 0
    %107 = vmatpush1.bf16.msra.mxu0 0
    %108 = vmatprep.subr.bf16.mxu0 0
    %109 = vmatpush1.bf16.msra.mxu0 0
    %110 = vmatprep.subr.bf16.mxu0 0
    %111 = vmatpush1.bf16.msra.mxu0 0
    %112 = vmatprep.mubr.bf16.mxu0 0
    %113 = vmatmul.mubr.bf16.gmra.mrb[0].mxu0 %v78
    %v114 = vpop.f32.mrb[0].mxu0
    %v115 = vadd.f32 %v68, %v114
    %v116 = vpop.f32.mrb[0].mxu0
    %v117 = vpop.f32.mrb[0].mxu0
    %v118 = vpop.f32.mrb[0].mxu0
    %119 = vdwg.mxu0
    %v120 = vmax.f32 %v115, 0.0
    %v121 = vpack.c.bf16 %v120, %v120
    %v122 = vld [vmem:[%s3] sm:$0xf]
    %v123 = vld [vmem:[%s3 + $0x4] sm:$0xf]
    %v124 = vld [vmem:[%s3 + $0x8] sm:$0xf]
    %v125 = vld [vmem:[%s3 + $0xc] sm:$0xf]
    %v126 = vld [vmem:[%s4] sm:$0x1]
    %v128 = vlaneseq
    %v129 = vshrl.u32 %v128, 7
    %v130 = vsub.s32 0, %v129
    %v131 = vrot.slane %v126, %v130
    %v137 = vunpack.c.l.b16 %v122
    %v138 = vunpack.c.l.b16 %v123
    %v139 = vunpack.c.l.b16 %v124
    %v140 = vunpack.c.l.b16 %v125
    %v141 = vpack.c.b16 %v138, %v137
    %v142 = vpack.c.b16 %v140, %v139
    %vm145 = vcmask 261120
    %v147 = vsel %vm145, %v121, 0
    %149 = vmatprep.subr.bf16.mxu0 0
    %150 = vmatpush1.bf16.msra.mxu0 %v141
    %151 = vmatprep.subr.bf16.mxu0 0
    %152 = vmatpush1.bf16.msra.mxu0 %v142
    %153 = vmatprep.subr.bf16.mxu0 0
    %154 = vmatpush1.bf16.msra.mxu0 0
    %155 = vmatprep.subr.bf16.mxu0 0
    %156 = vmatpush1.bf16.msra.mxu0 0
    %157 = vmatprep.subr.bf16.mxu0 0
    %158 = vmatpush1.bf16.msra.mxu0 0
    %159 = vmatprep.subr.bf16.mxu0 0
    %160 = vmatpush1.bf16.msra.mxu0 0
    %161 = vmatprep.subr.bf16.mxu0 0
    %162 = vmatpush1.bf16.msra.mxu0 0
    %163 = vmatprep.subr.bf16.mxu0 0
    %164 = vmatpush1.bf16.msra.mxu0 0
    %165 = vmatprep.subr.bf16.mxu0 0
    %166 = vmatpush1.bf16.msra.mxu0 0
    %167 = vmatprep.subr.bf16.mxu0 0
    %168 = vmatpush1.bf16.msra.mxu0 0
    %169 = vmatprep.subr.bf16.mxu0 0
    %170 = vmatpush1.bf16.msra.mxu0 0
    %171 = vmatprep.subr.bf16.mxu0 0
    %172 = vmatpush1.bf16.msra.mxu0 0
    %173 = vmatprep.subr.bf16.mxu0 0
    %174 = vmatpush1.bf16.msra.mxu0 0
    %175 = vmatprep.subr.bf16.mxu0 0
    %176 = vmatpush1.bf16.msra.mxu0 0
    %177 = vmatprep.subr.bf16.mxu0 0
    %178 = vmatpush1.bf16.msra.mxu0 0
    %179 = vmatprep.subr.bf16.mxu0 0
    %180 = vmatpush1.bf16.msra.mxu0 0
    %181 = vmatprep.mubr.bf16.mxu0 0
    %182 = vmatmul.mubr.bf16.gmra.mrb[0].mxu0 %v147
    %v183 = vpop.f32.mrb[0].mxu0
    %v184 = vadd.f32 %v131, %v183
    %v185 = vpop.f32.mrb[0].mxu0
    %v186 = vpop.f32.mrb[0].mxu0
    %v187 = vpop.f32.mrb[0].mxu0
    %188 = vdwg.mxu0
    %v189 = vmax.f32 %v184, 0.0
    %v190 = vpack.c.bf16 %v189, %v189
    %v191 = vld [vmem:[%s5] sm:$0xf]
    %v192 = vld [vmem:[%s5 + $0x4] sm:$0xf]
    %v193 = vld [vmem:[%s5 + $0x8] sm:$0xf]
    %v194 = vld [vmem:[%s5 + $0xc] sm:$0xf]
    %v195 = vld [vmem:[%s6] sm:$0x1]
    %v197 = vlaneseq
    %v198 = vshrl.u32 %v197, 7
    %v199 = vsub.s32 0, %v198
    %v200 = vrot.slane %v195, %v199
    %v206 = vunpack.c.l.b16 %v191
    %v207 = vunpack.c.l.b16 %v192
    %v208 = vunpack.c.l.b16 %v193
    %v209 = vunpack.c.l.b16 %v194
    %v210 = vpack.c.b16 %v207, %v206
    %v211 = vpack.c.b16 %v209, %v208
    %v215 = vsel %vm145, %v190, 0
    %217 = vmatprep.subr.bf16.mxu0 0
    %218 = vmatpush1.bf16.msra.mxu0 %v210
    %219 = vmatprep.subr.bf16.mxu0 0
    %220 = vmatpush1.bf16.msra.mxu0 %v211
    %221 = vmatprep.subr.bf16.mxu0 0
    %222 = vmatpush1.bf16.msra.mxu0 0
    %223 = vmatprep.subr.bf16.mxu0 0
    %224 = vmatpush1.bf16.msra.mxu0 0
    %225 = vmatprep.subr.bf16.mxu0 0
    %226 = vmatpush1.bf16.msra.mxu0 0
    %227 = vmatprep.subr.bf16.mxu0 0
    %228 = vmatpush1.bf16.msra.mxu0 0
    %229 = vmatprep.subr.bf16.mxu0 0
    %230 = vmatpush1.bf16.msra.mxu0 0
    %231 = vmatprep.subr.bf16.mxu0 0
    %232 = vmatpush1.bf16.msra.mxu0 0
    %233 = vmatprep.subr.bf16.mxu0 0
    %234 = vmatpush1.bf16.msra.mxu0 0
    %235 = vmatprep.subr.bf16.mxu0 0
    %236 = vmatpush1.bf16.msra.mxu0 0
    %237 = vmatprep.subr.bf16.mxu0 0
    %238 = vmatpush1.bf16.msra.mxu0 0
    %239 = vmatprep.subr.bf16.mxu0 0
    %240 = vmatpush1.bf16.msra.mxu0 0
    %241 = vmatprep.subr.bf16.mxu0 0
    %242 = vmatpush1.bf16.msra.mxu0 0
    %243 = vmatprep.subr.bf16.mxu0 0
    %244 = vmatpush1.bf16.msra.mxu0 0
    %245 = vmatprep.subr.bf16.mxu0 0
    %246 = vmatpush1.bf16.msra.mxu0 0
    %247 = vmatprep.subr.bf16.mxu0 0
    %248 = vmatpush1.bf16.msra.mxu0 0
    %249 = vmatprep.mubr.bf16.mxu0 0
    %250 = vmatmul.mubr.bf16.gmra.mrb[0].mxu0 %v215
    %v251 = vpop.f32.mrb[0].mxu0
    %v252 = vadd.f32 %v200, %v251
    %v253 = vpop.f32.mrb[0].mxu0
    %v254 = vpop.f32.mrb[0].mxu0
    %v255 = vpop.f32.mrb[0].mxu0
    %256 = vdwg.mxu0
    %v257 = vmax.f32 %v252, 0.0
    %v258 = vpack.c.bf16 %v257, %v257
    %v259 = vld [vmem:[%s7] sm:$0xf]
    %v260 = vld [vmem:[%s7 + $0x4] sm:$0xf]
    %v261 = vld [vmem:[%s7 + $0x8] sm:$0xf]
    %v262 = vld [vmem:[%s7 + $0xc] sm:$0xf]
    %v263 = vld [vmem:[%s7 + $0x10] sm:$0xf]
    %v264 = vld [vmem:[%s7 + $0x14] sm:$0xf]
    %v265 = vld [vmem:[%s7 + $0x18] sm:$0xf]
    %v266 = vld [vmem:[%s7 + $0x1c] sm:$0xf]
    %v267 = vld [vmem:[%s8] sm:$0x1]
    %v269 = vlaneseq
    %v270 = vshrl.u32 %v269, 7
    %v271 = vsub.s32 0, %v270
    %v272 = vrot.slane %v267, %v271
    %v282 = vunpack.c.l.b16 %v259
    %v283 = vunpack.c.l.b16 %v260
    %v284 = vunpack.c.l.b16 %v261
    %v285 = vunpack.c.l.b16 %v262
    %v286 = vunpack.c.l.b16 %v263
    %v287 = vunpack.c.l.b16 %v264
    %v288 = vunpack.c.l.b16 %v265
    %v289 = vunpack.c.l.b16 %v266
    %v290 = vpack.c.b16 %v283, %v282
    %v291 = vpack.c.b16 %v285, %v284
    %v292 = vpack.c.b16 %v287, %v286
    %v293 = vpack.c.b16 %v289, %v288
    %vm298 = vcmask 523264
    %v300 = vsel %vm298, %v258, 0
    %302 = vmatprep.subr.bf16.mxu0 0
    %303 = vmatpush1.bf16.msra.mxu0 %v290
    %304 = vmatprep.subr.bf16.mxu0 0
    %305 = vmatpush1.bf16.msra.mxu0 %v291
    %306 = vmatprep.subr.bf16.mxu0 0
    %307 = vmatpush1.bf16.msra.mxu0 %v292
    %308 = vmatprep.subr.bf16.mxu0 0
    %309 = vmatpush1.bf16.msra.mxu0 %v293
    %310 = vmatprep.subr.bf16.mxu0 0
    %311 = vmatpush1.bf16.msra.mxu0 0
    %312 = vmatprep.subr.bf16.mxu0 0
    %313 = vmatpush1.bf16.msra.mxu0 0
    %314 = vmatprep.subr.bf16.mxu0 0
    %315 = vmatpush1.bf16.msra.mxu0 0
    %316 = vmatprep.subr.bf16.mxu0 0
    %317 = vmatpush1.bf16.msra.mxu0 0
    %318 = vmatprep.subr.bf16.mxu0 0
    %319 = vmatpush1.bf16.msra.mxu0 0
    %320 = vmatprep.subr.bf16.mxu0 0
    %321 = vmatpush1.bf16.msra.mxu0 0
    %322 = vmatprep.subr.bf16.mxu0 0
    %323 = vmatpush1.bf16.msra.mxu0 0
    %324 = vmatprep.subr.bf16.mxu0 0
    %325 = vmatpush1.bf16.msra.mxu0 0
    %326 = vmatprep.subr.bf16.mxu0 0
    %327 = vmatpush1.bf16.msra.mxu0 0
    %328 = vmatprep.subr.bf16.mxu0 0
    %329 = vmatpush1.bf16.msra.mxu0 0
    %330 = vmatprep.subr.bf16.mxu0 0
    %331 = vmatpush1.bf16.msra.mxu0 0
    %332 = vmatprep.subr.bf16.mxu0 0
    %333 = vmatpush1.bf16.msra.mxu0 0
    %334 = vmatprep.mubr.bf16.mxu0 0
    %335 = vmatmul.mubr.bf16.gmra.mrb[0].mxu0 %v300
    %v336 = vpop.f32.mrb[0].mxu0
    %v337 = vadd.f32 %v272, %v336
    %v338 = vpop.f32.mrb[0].mxu0
    %v339 = vpop.f32.mrb[0].mxu0
    %v340 = vpop.f32.mrb[0].mxu0
    %341 = vdwg.mxu0
    %v342 = vlaneseq
    %v343 = vand.u32 %v342, 127
    %vm344 = vcmp.lt.s32.totalorder %v343, 4
    %vm345 = vcmp.eq.s32.totalorder %v343, 4
    %v346 = vsel %vm344, %v337, -inf
    %vm347 = vcmask 64512
    %v348 = vsel %vm347, %v346, -inf
    %349 = vmax.xlane.f32.xlu0 %v348
    %v350 = vpop.xlane.xlu0 %349
    %v351 = vsub.f32 %v346, %v350
    %v352 = vmul.f32 %v351, 1.442695
    %v353 = vpow.pop %v352
    %v354 = vsel %vm347, %v353, 0.0
    %355 = vadd.xlane.f32.xlu0 %v354
    %v356 = vpop.xlane.xlu0 %355
    %v357 = vrcp.pop %v356
    %v358 = vmul.f32 %v353, %v357
    %v359 = vsel %vm345, %v337, 0.0
    %v360 = vsel %vm344, %v358, %v359
    %361 = vst.msk [vmem:[%s9] sm:$0xff] %vm347, %v360
    // Predicated region
    $region46: #{ppo_forward.1} parent=1 // pred_check
      _
    $region47: #{ppo_forward.1} parent=1 // pred_check_branch
      %363 = sbr.rel (0) target = $region49
    $region48: #{ppo_forward.1} parent=1 // pred_region
      _
    $region49: #{ppo_forward.1} parent=1 // pred_fallthru
      _
    // Predicated region
    $region50: #{ppo_forward.1} parent=1 // pred_check
      _
    $region51: #{ppo_forward.1} parent=1 // pred_check_branch
      %365 = sbr.rel (0) target = $region53
    $region52: #{ppo_forward.1} parent=1 // pred_region
      _
    $region53: #{ppo_forward.1} parent=1 // pred_fallthru
      _
    %366 = vsyncpa [#allocation3], 1
    %367 = vsyncpa [#allocation5], 1

</llo_original>
